<compile_context>
chip_gen: v6e
topology: v6e:2x2x1
jax: 0.10.0
libtpu: 0.0.40
codegen_flags: <defaults>
</compile_context>

<pallas_src>
import functools

import jax
import jax.numpy as jnp
from jax.experimental import pallas as pl
from jax.experimental.pallas import tpu as pltpu

_LANE = 128     # TPU lane width; pad all feature dims to a multiple of this.
_SUBLANE = 16   # bf16 min sublane tile.


def _round_up(n, m):
    return -(-n // m) * m


def _cdiv(a, b):
    return -(-a // b)


def _dqn_mlp_kernel(x_ref, *refs, n_layers, negative_slope, compute_dtype):
    """Fused MLP forward for one batch tile.

    refs = (w0_ref, b0_ref, w1_ref, b1_ref, ..., out_ref)
    """
    out_ref = refs[-1]
    param_refs = refs[:-1]

    h = x_ref[...]  # bf16 -> native single-pass MXU matmul
    for i in range(n_layers):
        if i > 0:
            # F.leaky_relu (default slope 0.01): for 0 < slope < 1 this is just
            # a max.  h is f32 here (previous dot accumulated in f32); cast back
            # to bf16 so the next matmul stays on the bf16 MXU path.
            h = jnp.maximum(h, negative_slope * h).astype(compute_dtype)
        w = param_refs[2 * i][...]
        b = param_refs[2 * i + 1][...]
        h = jnp.dot(h, w, preferred_element_type=jnp.float32) + b
    out_ref[...] = h.astype(out_ref.dtype)


def prepare_dqn_params(params, compute_dtype=jnp.bfloat16):
    """Zero-pad every feature dim to a multiple of 128 and cast to bf16.

    Done ONCE (hoisted out of the forward).  Padding is exact: padded weight
    rows/cols and bias entries are zero, so padded input columns contribute
    nothing and padded output columns are sliced off by the wrapper.

    Args:
      params: list of (W, b) with W shape (in, out), b shape (out,).
    Returns:
      (flat_padded, in_dim, out_dim, pdims) where flat_padded is a tuple
      (W0p, b0p, W1p, b1p, ...) of padded bf16 arrays.
    """
    in_dim = params[0][0].shape[0]
    out_dim = params[-1][0].shape[1]
    dims = [in_dim] + [W.shape[1] for W, _ in params]
    pdims = tuple(_round_up(max(d, 1), _LANE) for d in dims)

    flat = []
    for i, (W, b) in enumerate(params):
        Wp = jnp.zeros((pdims[i], pdims[i + 1]), dtype=compute_dtype)
        Wp = Wp.at[: W.shape[0], : W.shape[1]].set(W.astype(compute_dtype))
        bp = jnp.zeros((1, pdims[i + 1]), dtype=compute_dtype)
        bp = bp.at[0, : b.shape[0]].set(b.astype(compute_dtype))
        flat.extend((Wp, bp))
    return tuple(flat), in_dim, out_dim, pdims


@functools.partial(
    jax.jit,
    static_argnames=(
        "in_dim", "out_dim", "pdims", "negative_slope", "tile_m", "compute_dtype"
    ),
)
def dqn_forward(
    x,
    flat_params,
    *,
    in_dim,
    out_dim,
    pdims,
    negative_slope=0.01,
    tile_m=1024,
    compute_dtype=jnp.bfloat16,
):
    """Run the DQN forward pass in a single fused Pallas kernel.

    Args:
      x: (batch, in_dim) activations (f32 or bf16).
      flat_params: padded params from prepare_dqn_params.
      pdims: padded feature dims (static tuple).
    Returns:
      (batch, out_dim) Q-values in x.dtype.
    """
    batch = x.shape[0]
    assert x.shape[1] == in_dim
    n_layers = len(pdims) - 1
    orig_dtype = x.dtype

    # ---- batch tiling: pad only to the bf16 sublane multiple (16), then pick
    # the number of tiles / tile size so grid * tm == pb with minimal waste.
    pb0 = _round_up(max(batch, 1), _SUBLANE)
    n_tiles = _cdiv(pb0, tile_m)
    if pb0 >= 512:
        # v7x has 2 TensorCores; give the "parallel" batch axis >= 2 tiles.
        n_tiles = max(n_tiles, 2)
    tm = _round_up(_cdiv(pb0, n_tiles), _SUBLANE)
    pb = n_tiles * tm

    xp = jnp.zeros((pb, pdims[0]), dtype=compute_dtype)
    xp = xp.at[:batch, :in_dim].set(x.astype(compute_dtype))

    kernel = functools.partial(
        _dqn_mlp_kernel,
        n_layers=n_layers,
        negative_slope=negative_slope,
        compute_dtype=compute_dtype,
    )

    # Params get constant index_maps -> stay resident in VMEM across grid steps.
    in_specs = [pl.BlockSpec((tm, pdims[0]), lambda i: (i, 0))]
    for li in range(n_layers):
        in_specs.append(
            pl.BlockSpec((pdims[li], pdims[li + 1]), lambda i: (0, 0))
        )
        in_specs.append(pl.BlockSpec((1, pdims[li + 1]), lambda i: (0, 0)))
    out_spec = pl.BlockSpec((tm, pdims[-1]), lambda i: (i, 0))

    cbytes = jnp.dtype(compute_dtype).itemsize
    param_bytes = sum(a.size * a.dtype.itemsize for a in flat_params)
    flops = 2 * pb * sum(pdims[i] * pdims[i + 1] for i in range(n_layers))
    bytes_accessed = (
        pb * pdims[0] * cbytes + param_bytes + pb * pdims[-1] * cbytes
    )

    # VMEM budget: double-buffered params + double-buffered in/out tiles +
    # f32 intermediate headroom.  Only override the 32 MiB default if needed;
    # stay below v7x's 64 MiB physical ceiling.
    vmem_est = (
        2 * param_bytes
        + 2 * tm * pdims[0] * cbytes
        + 2 * tm * pdims[-1] * cbytes
        + 2 * tm * max(pdims) * 4
    )
    vmem_limit = None
    if vmem_est > (32 << 20):
        vmem_limit = min(vmem_est + (8 << 20), 60 << 20)

    out_padded = pl.pallas_call(
        kernel,
        out_shape=jax.ShapeDtypeStruct((pb, pdims[-1]), compute_dtype),
        grid=(n_tiles,),
        in_specs=in_specs,
        out_specs=out_spec,
        compiler_params=pltpu.CompilerParams(
            dimension_semantics=("parallel",),
            vmem_limit_bytes=vmem_limit,
        ),
        cost_estimate=pl.CostEstimate(
            flops=flops, transcendentals=0, bytes_accessed=bytes_accessed
        ),
    )(xp, *flat_params)

    return out_padded[:batch, :out_dim].astype(orig_dtype)


def init_dqn_params(key, in_size, out_size, layers):
    """Init mirroring nn.Linear's U(-1/sqrt(fan_in), 1/sqrt(fan_in)).

    Returns list of (W, b) with W shape (in, out) — already transposed for h @ W.
    """
    sizes = [in_size] + list(layers) + [out_size]
    params = []
    for i in range(len(sizes) - 1):
        fan_in, fan_out = sizes[i], sizes[i + 1]
        key, kw, kb = jax.random.split(key, 3)
        bound = 1.0 / jnp.sqrt(jnp.float32(fan_in))
        W = jax.random.uniform(
            kw, (fan_in, fan_out), minval=-bound, maxval=bound, dtype=jnp.float32
        )
        b = jax.random.uniform(
            kb, (fan_out,), minval=-bound, maxval=bound, dtype=jnp.float32
        )
        params.append((W, b))
    return params


def dqn_reference(x, params, negative_slope=0.01):
    """Pure-JAX f32 reference matching the PyTorch forward semantics."""
    h = x @ params[0][0] + params[0][1]
    for W, b in params[1:]:
        h = jnp.where(h >= 0, h, negative_slope * h)
        h = h @ W + b
    return h


if __name__ == "__main__":
    # Small shapes consistent with the module: state dim 16, two hidden layers
    # of 32, 8 actions, batch of 2.
    batch, in_size, out_size = 2, 16, 8
    hidden_layers = [32, 32]

    key = jax.random.PRNGKey(0)
    key, kx = jax.random.split(key)
    x = jax.random.normal(kx, (batch, in_size), dtype=jnp.float32)

    params = init_dqn_params(key, in_size, out_size, hidden_layers)
    flat, in_dim, out_dim, pdims = prepare_dqn_params(params)  # padded once

    out = dqn_forward(x, flat, in_dim=in_dim, out_dim=out_dim, pdims=pdims)
    out = jax.block_until_ready(out)

    ref = dqn_reference(x, params)
    assert out.shape == (batch, out_size), out.shape
    # bf16 datapath -> relaxed tolerance vs. the f32 reference.
    assert jnp.allclose(out, ref, atol=5e-2, rtol=5e-2), (out, ref)

    # Also exercise a "real" non-tile-multiple batch (multiple grid tiles,
    # minimal padding).
    key, kx2 = jax.random.split(key)
    big = 1000
    x_big = jax.random.normal(kx2, (big, in_size), dtype=jnp.float32)
    out_big = jax.block_until_ready(
        dqn_forward(x_big, flat, in_dim=in_dim, out_dim=out_dim, pdims=pdims)
    )
    ref_big = dqn_reference(x_big, params)
    assert out_big.shape == (big, out_size)
    assert jnp.allclose(out_big, ref_big, atol=5e-2, rtol=5e-2)

    print("KERNEL_OK")
</pallas_src>

<mosaic_0001>
module attributes {stable_mosaic.version = 11 : i64} {
  func.func @_dqn_mlp_kernel(%arg0: i32, %arg1: memref<16x128xbf16, #tpu.memory_space<vmem>>, %arg2: memref<128x128xbf16, #tpu.memory_space<vmem>>, %arg3: memref<1x128xbf16, #tpu.memory_space<vmem>>, %arg4: memref<128x128xbf16, #tpu.memory_space<vmem>>, %arg5: memref<1x128xbf16, #tpu.memory_space<vmem>>, %arg6: memref<128x128xbf16, #tpu.memory_space<vmem>>, %arg7: memref<1x128xbf16, #tpu.memory_space<vmem>>, %arg8: memref<16x128xbf16, #tpu.memory_space<vmem>>) attributes {dimension_semantics = [#tpu.dimension_semantics<parallel>], iteration_bounds = array<i64: 1>, scalar_prefetch = 0 : i64, scratch_operands = 0 : i64, tpu.core_type = #tpu.core_type<tc>, window_params = [{transform_indices = @transform_0, window_bounds = array<i64: 16, 128>}, {pipeline_mode = #tpu.pipeline_mode<synchronous>, transform_indices = @transform_1, window_bounds = array<i64: 128, 128>}, {pipeline_mode = #tpu.pipeline_mode<synchronous>, transform_indices = @transform_2, window_bounds = array<i64: 1, 128>}, {pipeline_mode = #tpu.pipeline_mode<synchronous>, transform_indices = @transform_3, window_bounds = array<i64: 128, 128>}, {pipeline_mode = #tpu.pipeline_mode<synchronous>, transform_indices = @transform_4, window_bounds = array<i64: 1, 128>}, {pipeline_mode = #tpu.pipeline_mode<synchronous>, transform_indices = @transform_5, window_bounds = array<i64: 128, 128>}, {pipeline_mode = #tpu.pipeline_mode<synchronous>, transform_indices = @transform_6, window_bounds = array<i64: 1, 128>}, {transform_indices = @transform_7, window_bounds = array<i64: 16, 128>}]} {
    %c0 = arith.constant 0 : index
    %c0_0 = arith.constant 0 : index
    %0 = vector.load %arg1[%c0, %c0_0] : memref<16x128xbf16, #tpu.memory_space<vmem>>, vector<16x128xbf16>
    %c0_1 = arith.constant 0 : index
    %c0_2 = arith.constant 0 : index
    %1 = vector.load %arg2[%c0_1, %c0_2] : memref<128x128xbf16, #tpu.memory_space<vmem>>, vector<128x128xbf16>
    %c0_3 = arith.constant 0 : index
    %c0_4 = arith.constant 0 : index
    %2 = vector.load %arg3[%c0_3, %c0_4] : memref<1x128xbf16, #tpu.memory_space<vmem>>, vector<1x128xbf16>
    %cst = arith.constant dense<0.000000e+00> : vector<16x128xf32>
    %3 = tpu.matmul %0, %1, %cst {dimension_numbers = #tpu.dot_dimension_numbers<[1], [0], [0], [1], [0, 0, 1, 1], [], []>} : vector<16x128xbf16>, vector<128x128xbf16>, vector<16x128xf32> -> vector<16x128xf32>
    %4 = arith.extf %2 : vector<1x128xbf16> to vector<1x128xf32>
    %5 = vector.broadcast %4 : vector<1x128xf32> to vector<16x128xf32>
    %6 = arith.addf %3, %5 : vector<16x128xf32>
    %cst_5 = arith.constant 0.00999999977 : f32
    %7 = vector.broadcast %cst_5 : f32 to vector<16x128xf32>
    %8 = arith.mulf %7, %6 : vector<16x128xf32>
    %9 = arith.maximumf %6, %8 : vector<16x128xf32>
    %10 = arith.truncf %9 : vector<16x128xf32> to vector<16x128xbf16>
    %c0_6 = arith.constant 0 : index
    %c0_7 = arith.constant 0 : index
    %11 = vector.load %arg4[%c0_6, %c0_7] : memref<128x128xbf16, #tpu.memory_space<vmem>>, vector<128x128xbf16>
    %c0_8 = arith.constant 0 : index
    %c0_9 = arith.constant 0 : index
    %12 = vector.load %arg5[%c0_8, %c0_9] : memref<1x128xbf16, #tpu.memory_space<vmem>>, vector<1x128xbf16>
    %cst_10 = arith.constant dense<0.000000e+00> : vector<16x128xf32>
    %13 = tpu.matmul %10, %11, %cst_10 {dimension_numbers = #tpu.dot_dimension_numbers<[1], [0], [0], [1], [0, 0, 1, 1], [], []>} : vector<16x128xbf16>, vector<128x128xbf16>, vector<16x128xf32> -> vector<16x128xf32>
    %14 = arith.extf %12 : vector<1x128xbf16> to vector<1x128xf32>
    %15 = vector.broadcast %14 : vector<1x128xf32> to vector<16x128xf32>
    %16 = arith.addf %13, %15 : vector<16x128xf32>
    %cst_11 = arith.constant 0.00999999977 : f32
    %17 = vector.broadcast %cst_11 : f32 to vector<16x128xf32>
    %18 = arith.mulf %17, %16 : vector<16x128xf32>
    %19 = arith.maximumf %16, %18 : vector<16x128xf32>
    %20 = arith.truncf %19 : vector<16x128xf32> to vector<16x128xbf16>
    %c0_12 = arith.constant 0 : index
    %c0_13 = arith.constant 0 : index
    %21 = vector.load %arg6[%c0_12, %c0_13] : memref<128x128xbf16, #tpu.memory_space<vmem>>, vector<128x128xbf16>
    %c0_14 = arith.constant 0 : index
    %c0_15 = arith.constant 0 : index
    %22 = vector.load %arg7[%c0_14, %c0_15] : memref<1x128xbf16, #tpu.memory_space<vmem>>, vector<1x128xbf16>
    %cst_16 = arith.constant dense<0.000000e+00> : vector<16x128xf32>
    %23 = tpu.matmul %20, %21, %cst_16 {dimension_numbers = #tpu.dot_dimension_numbers<[1], [0], [0], [1], [0, 0, 1, 1], [], []>} : vector<16x128xbf16>, vector<128x128xbf16>, vector<16x128xf32> -> vector<16x128xf32>
    %24 = arith.extf %22 : vector<1x128xbf16> to vector<1x128xf32>
    %25 = vector.broadcast %24 : vector<1x128xf32> to vector<16x128xf32>
    %26 = arith.addf %23, %25 : vector<16x128xf32>
    %27 = arith.truncf %26 : vector<16x128xf32> to vector<16x128xbf16>
    %c0_17 = arith.constant 0 : index
    %c0_18 = arith.constant 0 : index
    %28 = vector.load %arg8[%c0_17, %c0_18] : memref<16x128xbf16, #tpu.memory_space<vmem>>, vector<16x128xbf16>
    tpu.vector_store %arg8[%c0_17, %c0_18], %27 {strides = array<i32>} : memref<16x128xbf16, #tpu.memory_space<vmem>>, vector<16x128xbf16>,
    return
  }
  func.func @transform_0(%arg0: i32) -> (i32, i32) {
    %c0_i32 = arith.constant 0 : i32
    %c0_i32_0 = arith.constant 0 : i32
    return %arg0, %c0_i32 : i32, i32
  }
  func.func @transform_1(%arg0: i32) -> (i32, i32) {
    %c0_i32 = arith.constant 0 : i32
    %c0_i32_0 = arith.constant 0 : i32
    %c0_i32_1 = arith.constant 0 : i32
    return %c0_i32, %c0_i32_0 : i32, i32
  }
  func.func @transform_2(%arg0: i32) -> (i32, i32) {
    %c0_i32 = arith.constant 0 : i32
    %c0_i32_0 = arith.constant 0 : i32
    %c0_i32_1 = arith.constant 0 : i32
    return %c0_i32, %c0_i32_0 : i32, i32
  }
  func.func @transform_3(%arg0: i32) -> (i32, i32) {
    %c0_i32 = arith.constant 0 : i32
    %c0_i32_0 = arith.constant 0 : i32
    %c0_i32_1 = arith.constant 0 : i32
    return %c0_i32, %c0_i32_0 : i32, i32
  }
  func.func @transform_4(%arg0: i32) -> (i32, i32) {
    %c0_i32 = arith.constant 0 : i32
    %c0_i32_0 = arith.constant 0 : i32
    %c0_i32_1 = arith.constant 0 : i32
    return %c0_i32, %c0_i32_0 : i32, i32
  }
  func.func @transform_5(%arg0: i32) -> (i32, i32) {
    %c0_i32 = arith.constant 0 : i32
    %c0_i32_0 = arith.constant 0 : i32
    %c0_i32_1 = arith.constant 0 : i32
    return %c0_i32, %c0_i32_0 : i32, i32
  }
  func.func @transform_6(%arg0: i32) -> (i32, i32) {
    %c0_i32 = arith.constant 0 : i32
    %c0_i32_0 = arith.constant 0 : i32
    %c0_i32_1 = arith.constant 0 : i32
    return %c0_i32, %c0_i32_0 : i32, i32
  }
  func.func @transform_7(%arg0: i32) -> (i32, i32) {
    %c0_i32 = arith.constant 0 : i32
    %c0_i32_0 = arith.constant 0 : i32
    return %arg0, %c0_i32 : i32, i32
  }
}

</mosaic_0001>

<llo_original>
// kernel: dqn_forward.1
$region0: #{dqn_forward.1}
  #allocation0 [shape = 'u32[]', space=smem, size = 0x4, offset = 0x4, fixed_abs, tag = 'smem constant byte address 0x4 - core index']
  #allocation1 [shape = 'u32[144,128]{1,0:T(1,128)}', space=vmem, size = 0x12000, scoped, tag = 'internal scratch']
  %s0 = inlined_call_operand.vmem [shape: bf16[16,128], index: 0, kind: input, shape index: {}]
  %s1 = inlined_call_operand.hbm [shape: bf16[128,128], index: 1, kind: input, shape index: {}]
  %s2 = inlined_call_operand.vmem [shape: bf16[1,128], index: 2, kind: input, shape index: {}]
  %s3 = inlined_call_operand.hbm [shape: bf16[128,128], index: 3, kind: input, shape index: {}]
  %s4 = inlined_call_operand.vmem [shape: bf16[1,128], index: 4, kind: input, shape index: {}]
  %s5 = inlined_call_operand.hbm [shape: bf16[128,128], index: 5, kind: input, shape index: {}]
  %s6 = inlined_call_operand.vmem [shape: bf16[1,128], index: 6, kind: input, shape index: {}]
  %s7 = inlined_call_operand.vmem [shape: bf16[16,128], index: 7, kind: output, shape index: {}]
  %s8 = sld [smem:[#allocation0]]
  $region50: #{dqn_forward.1} parent=0
    _
  %s10 = ssub.s32 1, %s8
  %s11 = scalar_select 0, %s10, %s8
  $region1: #{dqn_forward.1} parent=0
    #allocation2 [shape = 'u8[32768]{0}', space=vmem, size = 0x8000, scoped, tag = 'input window, operand 1, single buffered']
    #allocation3 [shape = 's32[1]{0}', space=sflag, size = 0x4, scoped, tag = 'scoped memory for dqn_forward.1']
    #allocation4 [shape = 'u8[32768]{0}', space=vmem, size = 0x8000, scoped, tag = 'input window, operand 3, single buffered']
    #allocation5 [shape = 's32[1]{0}', space=sflag, size = 0x4, scoped, tag = 'scoped memory for dqn_forward.1']
    #allocation6 [shape = 'u8[32768]{0}', space=vmem, size = 0x8000, scoped, tag = 'input window, operand 5, single buffered']
    %12 = vsyncpa [#allocation3], 0
    %13 = vsyncpa [#allocation5], 0
    // Predicated region
    $region2: #{dqn_forward.1} parent=1 // pred_check
      _
    $region3: #{dqn_forward.1} parent=1 // pred_check_branch
      %15 = sbr.rel (0) target = $region5
    $region4: #{dqn_forward.1} parent=1 // pred_region
      _
    $region5: #{dqn_forward.1} parent=1 // pred_fallthru
      _
    // Predicated region
    $region6: #{dqn_forward.1} parent=1 // pred_check
      _
    $region7: #{dqn_forward.1} parent=1 // pred_check_branch
      %17 = sbr.rel (0) target = $region9
    $region8: #{dqn_forward.1} parent=1 // pred_region
      %s19 = ssub.s32 1024, 1024
      %20 = vsyncadd [#allocation3], %s19
      %s21 = sshll.u32 [#allocation2], 4
      %s22 = int_to_ptr.vmem [resolvable:$true] %s21
      %27 = dma.hbm_to_vmem [thread:$0]  %s1, 1024, %s22, [#allocation3], 64, 64, 4
    $region9: #{dqn_forward.1} parent=1 // pred_fallthru
      _
    // Predicated region
    $region10: #{dqn_forward.1} parent=1 // pred_check
      _
    $region11: #{dqn_forward.1} parent=1 // pred_check_branch
      %29 = sbr.rel (0) target = $region13
    $region12: #{dqn_forward.1} parent=1 // pred_region
      _
    $region13: #{dqn_forward.1} parent=1 // pred_fallthru
      _
    // Predicated region
    $region14: #{dqn_forward.1} parent=1 // pred_check
      _
    $region15: #{dqn_forward.1} parent=1 // pred_check_branch
      %31 = sbr.rel (0) target = $region17
    $region16: #{dqn_forward.1} parent=1 // pred_region
      %s33 = ssub.s32 1024, 1024
      %34 = vsyncadd [#allocation5], %s33
      %s35 = sshll.u32 [#allocation4], 4
      %s36 = int_to_ptr.vmem [resolvable:$true] %s35
      %41 = dma.hbm_to_vmem [thread:$0]  %s3, 1024, %s36, [#allocation5], 64, 64, 4
    $region17: #{dqn_forward.1} parent=1 // pred_fallthru
      _
    // Predicated region
    $region18: #{dqn_forward.1} parent=1 // pred_check
      _
    $region19: #{dqn_forward.1} parent=1 // pred_check_branch
      %43 = sbr.rel (0) target = $region21
    $region20: #{dqn_forward.1} parent=1 // pred_region
      _
    $region21: #{dqn_forward.1} parent=1 // pred_fallthru
      _
    // Predicated region
    $region22: #{dqn_forward.1} parent=1 // pred_check
      _
    $region23: #{dqn_forward.1} parent=1 // pred_check_branch
      %45 = sbr.rel (0) target = $region25
    $region24: #{dqn_forward.1} parent=1 // pred_region
      %s47 = ssub.s32 1024, 1024
      %48 = vsyncadd [#allocation5], %s47
      %s49 = sshll.u32 [#allocation6], 4
      %s50 = int_to_ptr.vmem [resolvable:$true] %s49
      %55 = dma.hbm_to_vmem [thread:$0]  %s5, 1024, %s50, [#allocation5], 64, 64, 4
    $region25: #{dqn_forward.1} parent=1 // pred_fallthru
      _
    // Predicated region
    $region26: #{dqn_forward.1} parent=1 // pred_check
      _
    $region27: #{dqn_forward.1} parent=1 // pred_check_branch
      %57 = sbr.rel (0) target = $region29
    $region28: #{dqn_forward.1} parent=1 // pred_region
      _
    $region29: #{dqn_forward.1} parent=1 // pred_fallthru
      _
    // Predicated region
    $region30: #{dqn_forward.1} parent=1 // pred_check
      _
    $region31: #{dqn_forward.1} parent=1 // pred_check_branch
      %59 = sbr.rel (0) target = $region33
    $region32: #{dqn_forward.1} parent=1 // pred_region
      %60 = dma.done [#allocation3], 1024
    $region33: #{dqn_forward.1} parent=1 // pred_fallthru
      _
    // Predicated region
    $region34: #{dqn_forward.1} parent=1 // pred_check
      _
    $region35: #{dqn_forward.1} parent=1 // pred_check_branch
      %62 = sbr.rel (0) target = $region37
    $region36: #{dqn_forward.1} parent=1 // pred_region
      %63 = dma.done [#allocation5], 1024
    $region37: #{dqn_forward.1} parent=1 // pred_fallthru
      _
    // Predicated region
    $region38: #{dqn_forward.1} parent=1 // pred_check
      _
    $region39: #{dqn_forward.1} parent=1 // pred_check_branch
      %65 = sbr.rel (0) target = $region41
    $region40: #{dqn_forward.1} parent=1 // pred_region
      %66 = dma.done [#allocation5], 1024
    $region41: #{dqn_forward.1} parent=1 // pred_fallthru
      _
    %v68 = vld [vmem:[%s0] sm:$0xf]
    %v69 = vld [vmem:[%s0 + $0x4] sm:$0xf]
    %v70 = vld [vmem:[#allocation2] sm:$0xf]
    %v71 = vld [vmem:[#allocation2 + $0x4] sm:$0xf]
    %v72 = vld [vmem:[#allocation2 + $0x8] sm:$0xf]
    %v73 = vld [vmem:[#allocation2 + $0xc] sm:$0xf]
    %v74 = vld [vmem:[#allocation2 + $0x10] sm:$0xf]
    %v75 = vld [vmem:[#allocation2 + $0x14] sm:$0xf]
    %v76 = vld [vmem:[#allocation2 + $0x18] sm:$0xf]
    %v77 = vld [vmem:[#allocation2 + $0x1c] sm:$0xf]
    %v78 = vld [vmem:[#allocation2 + $0x20] sm:$0xf]
    %v79 = vld [vmem:[#allocation2 + $0x24] sm:$0xf]
    %v80 = vld [vmem:[#allocation2 + $0x28] sm:$0xf]
    %v81 = vld [vmem:[#allocation2 + $0x2c] sm:$0xf]
    %v82 = vld [vmem:[#allocation2 + $0x30] sm:$0xf]
    %v83 = vld [vmem:[#allocation2 + $0x34] sm:$0xf]
    %v84 = vld [vmem:[#allocation2 + $0x38] sm:$0xf]
    %v85 = vld [vmem:[#allocation2 + $0x3c] sm:$0xf]
    %v86 = vld [vmem:[%s2] sm:$0x1]
    %v87 = vunpack.c.l.bf16 %v86
    %v88 = vlaneseq
    %v89 = vshrl.u32 %v88, 7
    %v90 = vsub.s32 0, %v89
    %v91 = vrot.slane %v87, %v90
    %v94 = vunpack.c.l.b16 %v68
    %v95 = vunpack.c.l.b16 %v69
    %v96 = vpack.c.b16 %v95, %v94
    %v114 = vunpack.c.l.b16 %v70
    %v115 = vunpack.c.l.b16 %v71
    %v116 = vunpack.c.l.b16 %v72
    %v117 = vunpack.c.l.b16 %v73
    %v118 = vunpack.c.l.b16 %v74
    %v119 = vunpack.c.l.b16 %v75
    %v120 = vunpack.c.l.b16 %v76
    %v121 = vunpack.c.l.b16 %v77
    %v122 = vunpack.c.l.b16 %v78
    %v123 = vunpack.c.l.b16 %v79
    %v124 = vunpack.c.l.b16 %v80
    %v125 = vunpack.c.l.b16 %v81
    %v126 = vunpack.c.l.b16 %v82
    %v127 = vunpack.c.l.b16 %v83
    %v128 = vunpack.c.l.b16 %v84
    %v129 = vunpack.c.l.b16 %v85
    %v130 = vpack.c.b16 %v115, %v114
    %v131 = vpack.c.b16 %v117, %v116
    %v132 = vpack.c.b16 %v119, %v118
    %v133 = vpack.c.b16 %v121, %v120
    %v134 = vpack.c.b16 %v123, %v122
    %v135 = vpack.c.b16 %v125, %v124
    %v136 = vpack.c.b16 %v127, %v126
    %v137 = vpack.c.b16 %v129, %v128
    %146 = vmatprep.subr.bf16.mxu0 0
    %147 = vmatpush1.bf16.msra.mxu0 %v137
    %148 = vmatprep.subr.bf16.mxu0 0
    %149 = vmatpush1.bf16.msra.mxu0 %v136
    %150 = vmatprep.subr.bf16.mxu0 0
    %151 = vmatpush1.bf16.msra.mxu0 %v135
    %152 = vmatprep.subr.bf16.mxu0 0
    %153 = vmatpush1.bf16.msra.mxu0 %v134
    %154 = vmatprep.subr.bf16.mxu0 0
    %155 = vmatpush1.bf16.msra.mxu0 %v133
    %156 = vmatprep.subr.bf16.mxu0 0
    %157 = vmatpush1.bf16.msra.mxu0 %v132
    %158 = vmatprep.subr.bf16.mxu0 0
    %159 = vmatpush1.bf16.msra.mxu0 %v131
    %160 = vmatprep.subr.bf16.mxu0 0
    %161 = vmatpush1.bf16.msra.mxu0 %v130
    %162 = vmatprep.subr.bf16.mxu0 0
    %163 = vmatpush2.bf16.msra.mxu0 0
    %164 = vmatprep.subr.bf16.mxu0 0
    %165 = vmatpush2.bf16.msra.mxu0 0
    %166 = vmatprep.subr.bf16.mxu0 0
    %167 = vmatpush2.bf16.msra.mxu0 0
    %168 = vmatprep.subr.bf16.mxu0 0
    %169 = vmatpush2.bf16.msra.mxu0 0
    %170 = vmatprep.subr.bf16.mxu0 0
    %171 = vmatpush2.bf16.msra.mxu0 0
    %172 = vmatprep.subr.bf16.mxu0 0
    %173 = vmatpush2.bf16.msra.mxu0 0
    %174 = vmatprep.subr.bf16.mxu0 0
    %175 = vmatpush2.bf16.msra.mxu0 0
    %176 = vmatprep.subr.bf16.mxu0 0
    %177 = vmatpush2.bf16.msra.mxu0 0
    %178 = vmatprep.mubr.bf16.mxu0 0
    %179 = vmatmul.mubr.bf16.gmra.mxu0 %v96
    %v180 = vpop.f32.mrf.mxu0
    %v181 = vadd.f32 %v91, %v180
    %v182 = vpop.f32.mrf.mxu0
    %v183 = vpop.f32.mrf.mxu0
    %v184 = vadd.f32 %v91, %v183
    %v185 = vpop.f32.mrf.mxu0
    %186 = vdwg.mxu0
    %v187 = vmul.f32 %v181, 0.01
    %v188 = vmul.f32 %v184, 0.01
    %v189 = vmax.f32 %v181, %v187
    %v190 = vmax.f32 %v184, %v188
    %v191 = vpack.c.bf16 %v190, %v189
    %v192 = vld [vmem:[#allocation4] sm:$0xf]
    %v193 = vld [vmem:[#allocation4 + $0x4] sm:$0xf]
    %v194 = vld [vmem:[#allocation4 + $0x8] sm:$0xf]
    %v195 = vld [vmem:[#allocation4 + $0xc] sm:$0xf]
    %v196 = vld [vmem:[#allocation4 + $0x10] sm:$0xf]
    %v197 = vld [vmem:[#allocation4 + $0x14] sm:$0xf]
    %v198 = vld [vmem:[#allocation4 + $0x18] sm:$0xf]
    %v199 = vld [vmem:[#allocation4 + $0x1c] sm:$0xf]
    %v200 = vld [vmem:[#allocation4 + $0x20] sm:$0xf]
    %v201 = vld [vmem:[#allocation4 + $0x24] sm:$0xf]
    %v202 = vld [vmem:[#allocation4 + $0x28] sm:$0xf]
    %v203 = vld [vmem:[#allocation4 + $0x2c] sm:$0xf]
    %v204 = vld [vmem:[#allocation4 + $0x30] sm:$0xf]
    %v205 = vld [vmem:[#allocation4 + $0x34] sm:$0xf]
    %v206 = vld [vmem:[#allocation4 + $0x38] sm:$0xf]
    %v207 = vld [vmem:[#allocation4 + $0x3c] sm:$0xf]
    %v208 = vld [vmem:[%s4] sm:$0x1]
    %v209 = vunpack.c.l.bf16 %v208
    %v210 = vlaneseq
    %v211 = vshrl.u32 %v210, 7
    %v212 = vsub.s32 0, %v211
    %v213 = vrot.slane %v209, %v212
    %v230 = vunpack.c.l.b16 %v192
    %v231 = vunpack.c.l.b16 %v193
    %v232 = vunpack.c.l.b16 %v194
    %v233 = vunpack.c.l.b16 %v195
    %v234 = vunpack.c.l.b16 %v196
    %v235 = vunpack.c.l.b16 %v197
    %v236 = vunpack.c.l.b16 %v198
    %v237 = vunpack.c.l.b16 %v199
    %v238 = vunpack.c.l.b16 %v200
    %v239 = vunpack.c.l.b16 %v201
    %v240 = vunpack.c.l.b16 %v202
    %v241 = vunpack.c.l.b16 %v203
    %v242 = vunpack.c.l.b16 %v204
    %v243 = vunpack.c.l.b16 %v205
    %v244 = vunpack.c.l.b16 %v206
    %v245 = vunpack.c.l.b16 %v207
    %v246 = vpack.c.b16 %v231, %v230
    %v247 = vpack.c.b16 %v233, %v232
    %v248 = vpack.c.b16 %v235, %v234
    %v249 = vpack.c.b16 %v237, %v236
    %v250 = vpack.c.b16 %v239, %v238
    %v251 = vpack.c.b16 %v241, %v240
    %v252 = vpack.c.b16 %v243, %v242
    %v253 = vpack.c.b16 %v245, %v244
    %262 = vmatprep.subr.bf16.mxu0 0
    %263 = vmatpush1.bf16.msra.mxu0 %v253
    %264 = vmatprep.subr.bf16.mxu0 0
    %265 = vmatpush1.bf16.msra.mxu0 %v252
    %266 = vmatprep.subr.bf16.mxu0 0
    %267 = vmatpush1.bf16.msra.mxu0 %v251
    %268 = vmatprep.subr.bf16.mxu0 0
    %269 = vmatpush1.bf16.msra.mxu0 %v250
    %270 = vmatprep.subr.bf16.mxu0 0
    %271 = vmatpush1.bf16.msra.mxu0 %v249
    %272 = vmatprep.subr.bf16.mxu0 0
    %273 = vmatpush1.bf16.msra.mxu0 %v248
    %274 = vmatprep.subr.bf16.mxu0 0
    %275 = vmatpush1.bf16.msra.mxu0 %v247
    %276 = vmatprep.subr.bf16.mxu0 0
    %277 = vmatpush1.bf16.msra.mxu0 %v246
    %278 = vmatprep.subr.bf16.mxu0 0
    %279 = vmatpush2.bf16.msra.mxu0 0
    %280 = vmatprep.subr.bf16.mxu0 0
    %281 = vmatpush2.bf16.msra.mxu0 0
    %282 = vmatprep.subr.bf16.mxu0 0
    %283 = vmatpush2.bf16.msra.mxu0 0
    %284 = vmatprep.subr.bf16.mxu0 0
    %285 = vmatpush2.bf16.msra.mxu0 0
    %286 = vmatprep.subr.bf16.mxu0 0
    %287 = vmatpush2.bf16.msra.mxu0 0
    %288 = vmatprep.subr.bf16.mxu0 0
    %289 = vmatpush2.bf16.msra.mxu0 0
    %290 = vmatprep.subr.bf16.mxu0 0
    %291 = vmatpush2.bf16.msra.mxu0 0
    %292 = vmatprep.subr.bf16.mxu0 0
    %293 = vmatpush2.bf16.msra.mxu0 0
    %294 = vmatprep.mubr.bf16.mxu0 0
    %295 = vmatmul.mubr.bf16.gmra.mxu0 %v191
    %v296 = vpop.f32.mrf.mxu0
    %v297 = vadd.f32 %v213, %v296
    %v298 = vpop.f32.mrf.mxu0
    %v299 = vpop.f32.mrf.mxu0
    %v300 = vadd.f32 %v213, %v299
    %v301 = vpop.f32.mrf.mxu0
    %302 = vdwg.mxu0
    %v303 = vmul.f32 %v297, 0.01
    %v304 = vmul.f32 %v300, 0.01
    %v305 = vmax.f32 %v297, %v303
    %v306 = vmax.f32 %v300, %v304
    %v307 = vpack.c.bf16 %v306, %v305
    %v308 = vld [vmem:[#allocation6] sm:$0xf]
    %v309 = vld [vmem:[#allocation6 + $0x4] sm:$0xf]
    %v310 = vld [vmem:[#allocation6 + $0x8] sm:$0xf]
    %v311 = vld [vmem:[#allocation6 + $0xc] sm:$0xf]
    %v312 = vld [vmem:[#allocation6 + $0x10] sm:$0xf]
    %v313 = vld [vmem:[#allocation6 + $0x14] sm:$0xf]
    %v314 = vld [vmem:[#allocation6 + $0x18] sm:$0xf]
    %v315 = vld [vmem:[#allocation6 + $0x1c] sm:$0xf]
    %v316 = vld [vmem:[#allocation6 + $0x20] sm:$0xf]
    %v317 = vld [vmem:[#allocation6 + $0x24] sm:$0xf]
    %v318 = vld [vmem:[#allocation6 + $0x28] sm:$0xf]
    %v319 = vld [vmem:[#allocation6 + $0x2c] sm:$0xf]
    %v320 = vld [vmem:[#allocation6 + $0x30] sm:$0xf]
    %v321 = vld [vmem:[#allocation6 + $0x34] sm:$0xf]
    %v322 = vld [vmem:[#allocation6 + $0x38] sm:$0xf]
    %v323 = vld [vmem:[#allocation6 + $0x3c] sm:$0xf]
    %v324 = vld [vmem:[%s6] sm:$0x1]
    %v325 = vunpack.c.l.bf16 %v324
    %v326 = vlaneseq
    %v327 = vshrl.u32 %v326, 7
    %v328 = vsub.s32 0, %v327
    %v329 = vrot.slane %v325, %v328
    %v346 = vunpack.c.l.b16 %v308
    %v347 = vunpack.c.l.b16 %v309
    %v348 = vunpack.c.l.b16 %v310
    %v349 = vunpack.c.l.b16 %v311
    %v350 = vunpack.c.l.b16 %v312
    %v351 = vunpack.c.l.b16 %v313
    %v352 = vunpack.c.l.b16 %v314
    %v353 = vunpack.c.l.b16 %v315
    %v354 = vunpack.c.l.b16 %v316
    %v355 = vunpack.c.l.b16 %v317
    %v356 = vunpack.c.l.b16 %v318
    %v357 = vunpack.c.l.b16 %v319
    %v358 = vunpack.c.l.b16 %v320
    %v359 = vunpack.c.l.b16 %v321
    %v360 = vunpack.c.l.b16 %v322
    %v361 = vunpack.c.l.b16 %v323
    %v362 = vpack.c.b16 %v347, %v346
    %v363 = vpack.c.b16 %v349, %v348
    %v364 = vpack.c.b16 %v351, %v350
    %v365 = vpack.c.b16 %v353, %v352
    %v366 = vpack.c.b16 %v355, %v354
    %v367 = vpack.c.b16 %v357, %v356
    %v368 = vpack.c.b16 %v359, %v358
    %v369 = vpack.c.b16 %v361, %v360
    %378 = vmatprep.subr.bf16.mxu0 0
    %379 = vmatpush1.bf16.msra.mxu0 %v369
    %380 = vmatprep.subr.bf16.mxu0 0
    %381 = vmatpush1.bf16.msra.mxu0 %v368
    %382 = vmatprep.subr.bf16.mxu0 0
    %383 = vmatpush1.bf16.msra.mxu0 %v367
    %384 = vmatprep.subr.bf16.mxu0 0
    %385 = vmatpush1.bf16.msra.mxu0 %v366
    %386 = vmatprep.subr.bf16.mxu0 0
    %387 = vmatpush1.bf16.msra.mxu0 %v365
    %388 = vmatprep.subr.bf16.mxu0 0
    %389 = vmatpush1.bf16.msra.mxu0 %v364
    %390 = vmatprep.subr.bf16.mxu0 0
    %391 = vmatpush1.bf16.msra.mxu0 %v363
    %392 = vmatprep.subr.bf16.mxu0 0
    %393 = vmatpush1.bf16.msra.mxu0 %v362
    %394 = vmatprep.subr.bf16.mxu0 0
    %395 = vmatpush2.bf16.msra.mxu0 0
    %396 = vmatprep.subr.bf16.mxu0 0
    %397 = vmatpush2.bf16.msra.mxu0 0
    %398 = vmatprep.subr.bf16.mxu0 0
    %399 = vmatpush2.bf16.msra.mxu0 0
    %400 = vmatprep.subr.bf16.mxu0 0
    %401 = vmatpush2.bf16.msra.mxu0 0
    %402 = vmatprep.subr.bf16.mxu0 0
    %403 = vmatpush2.bf16.msra.mxu0 0
    %404 = vmatprep.subr.bf16.mxu0 0
    %405 = vmatpush2.bf16.msra.mxu0 0
    %406 = vmatprep.subr.bf16.mxu0 0
    %407 = vmatpush2.bf16.msra.mxu0 0
    %408 = vmatprep.subr.bf16.mxu0 0
    %409 = vmatpush2.bf16.msra.mxu0 0
    %410 = vmatprep.mubr.bf16.mxu0 0
    %411 = vmatmul.mubr.bf16.gmra.mxu0 %v307
    %v412 = vpop.f32.mrf.mxu0
    %v413 = vadd.f32 %v329, %v412
    %v414 = vpop.f32.mrf.mxu0
    %v415 = vpop.f32.mrf.mxu0
    %v416 = vadd.f32 %v329, %v415
    %v417 = vpop.f32.mrf.mxu0
    %418 = vdwg.mxu0
    %v419 = vpack.c.bf16 %v416, %v413
    %v421 = vunpack.c.l.b16 %v419
    %v422 = vunpack.c.h.b16 %v419
    %v423 = vpack.c.b16 %v421, %v421
    %v424 = vpack.c.b16 %v422, %v422
    %427 = vst [vmem:[%s7] sm:$0xf] %v423
    %428 = vst [vmem:[%s7 + $0x4] sm:$0xf] %v424
    // Predicated region
    $region42: #{dqn_forward.1} parent=1 // pred_check
      _
    $region43: #{dqn_forward.1} parent=1 // pred_check_branch
      %430 = sbr.rel (0) target = $region45
    $region44: #{dqn_forward.1} parent=1 // pred_region
      _
    $region45: #{dqn_forward.1} parent=1 // pred_fallthru
      _
    // Predicated region
    $region46: #{dqn_forward.1} parent=1 // pred_check
      _
    $region47: #{dqn_forward.1} parent=1 // pred_check_branch
      %432 = sbr.rel (0) target = $region49
    $region48: #{dqn_forward.1} parent=1 // pred_region
      _
    $region49: #{dqn_forward.1} parent=1 // pred_fallthru
      _
    %433 = vsyncpa [#allocation3], 1
    %434 = vsyncpa [#allocation5], 1

</llo_original>
